<compile_context>
chip_gen: v6e
topology: v6e:2x2x1
jax: 0.10.0
libtpu: 0.0.40
codegen_flags: <defaults>
</compile_context>

<pallas_src>
import math

import jax
import jax.numpy as jnp
from jax.experimental import pallas as pl
from jax.experimental.pallas import tpu as pltpu

_LANE = 128
_BLOCK_BYTE_CAP = 4 << 20      # ~4 MiB blocks: amortizes the ~0.35 us/step grid overhead
_MIN_SPLIT_BYTES = 1 << 20     # only force a >=2-step grid (megacore) above this size


# ----------------------------- kernels ------------------------------------- #

def _row_scale_mult_kernel(scale_ref, x1_ref, o_ref):
    # scale_ref: (t_r, 1) per-row scalar; x1_ref / o_ref: (t_r, t_hw).
    # Pure VPU broadcast-multiply; strictly HBM-bound.
    o_ref[...] = x1_ref[...] * scale_ref[...]


def _elementwise_mult_kernel(x1_ref, x2_ref, o_ref):
    # Both (t_r, t_hw): the "shapes already compatible" branch of FusionMult.
    o_ref[...] = x1_ref[...] * x2_ref[...]


# --------------------------- tiling helpers --------------------------------- #

def _row_base(dtype):
    """Sublane tile base: sub-32-bit dtypes pack along sublanes."""
    itemsize = jnp.dtype(dtype).itemsize
    if itemsize >= 4:
        return 8
    if itemsize == 2:
        return 16
    return 32


def _divisor_tile(dim, base, cap):
    """Largest multiple of `base` that divides `dim` and is <= cap (dim % base == 0)."""
    n = dim // base
    cap_mult = max(1, cap // base)
    best = 1
    for d in range(1, n + 1):
        if n % d == 0 and d <= cap_mult:
            best = d
    return base * best


def _pick_blocks(rows, cols, itemsize, row_base):
    """Pick (t_r, t_hw) for a padded (rows, cols) 2D view. rows%row_base==0, cols%128==0."""
    # Grow the lane axis first: long contiguous DMA descriptors + unmasked vst.
    lane_cap = max(_LANE, _BLOCK_BYTE_CAP // (row_base * itemsize))
    t_hw = _divisor_tile(cols, _LANE, lane_cap)
    row_cap = max(row_base, _BLOCK_BYTE_CAP // (t_hw * itemsize))
    t_r = _divisor_tile(rows, row_base, row_cap)

    # Core-count awareness: keep >=2 grid steps on a "parallel" axis for mid/large
    # inputs so both v7x TensorCores get work.
    if (rows // t_r) * (cols // t_hw) == 1 and rows * cols * itemsize > _MIN_SPLIT_BYTES:
        if rows >= 2 * row_base:
            t_r = _divisor_tile(rows, row_base, rows // 2)
        elif cols >= 2 * _LANE:
            t_hw = _divisor_tile(cols, _LANE, cols // 2)
    return t_r, t_hw


def _compiler_params(single_buffer_bytes):
    # Double-buffered footprint + headroom; clamp under v7x's 64 MiB physical VMEM.
    limit = int(min(max(2 * single_buffer_bytes + (4 << 20), 32 << 20), 56 << 20))
    return pltpu.CompilerParams(
        dimension_semantics=("parallel", "parallel"),
        vmem_limit_bytes=limit,
    )


# --------------------------- pallas_call wrappers ---------------------------- #

def _row_scale_mult(x1_2d, scale_col):
    """x1_2d: (R, HW); scale_col: (R, 1). Returns x1_2d * scale_col, shape (R, HW)."""
    dtype = x1_2d.dtype
    row_base = _row_base(dtype)
    R, HW = x1_2d.shape
    rp = (-R) % row_base
    cp = (-HW) % _LANE
    x1p = jnp.pad(x1_2d, ((0, rp), (0, cp))) if (rp or cp) else x1_2d
    sp = jnp.pad(scale_col, ((0, rp), (0, 0))) if rp else scale_col
    Rp, HWp = R + rp, HW + cp

    t_r, t_hw = _pick_blocks(Rp, HWp, dtype.itemsize, row_base)
    grid = (Rp // t_r, HWp // t_hw)
    block_bytes = 2 * t_r * t_hw * dtype.itemsize + t_r * dtype.itemsize

    out = pl.pallas_call(
        _row_scale_mult_kernel,
        out_shape=jax.ShapeDtypeStruct((Rp, HWp), dtype),
        grid=grid,
        in_specs=[
            pl.BlockSpec((t_r, 1), lambda i, j: (i, 0)),
            pl.BlockSpec((t_r, t_hw), lambda i, j: (i, j)),
        ],
        out_specs=pl.BlockSpec((t_r, t_hw), lambda i, j: (i, j)),
        compiler_params=_compiler_params(block_bytes),
    )(sp, x1p)
    return out[:R, :HW] if (rp or cp) else out


def _elementwise_mult(a_2d, b_2d):
    """Both (R, HW), same dtype. Returns a_2d * b_2d."""
    dtype = a_2d.dtype
    row_base = _row_base(dtype)
    R, HW = a_2d.shape
    rp = (-R) % row_base
    cp = (-HW) % _LANE
    if rp or cp:
        a_2d = jnp.pad(a_2d, ((0, rp), (0, cp)))
        b_2d = jnp.pad(b_2d, ((0, rp), (0, cp)))
    Rp, HWp = R + rp, HW + cp

    t_r, t_hw = _pick_blocks(Rp, HWp, dtype.itemsize, row_base)
    grid = (Rp // t_r, HWp // t_hw)
    block_bytes = 3 * t_r * t_hw * dtype.itemsize

    out = pl.pallas_call(
        _elementwise_mult_kernel,
        out_shape=jax.ShapeDtypeStruct((Rp, HWp), dtype),
        grid=grid,
        in_specs=[
            pl.BlockSpec((t_r, t_hw), lambda i, j: (i, j)),
            pl.BlockSpec((t_r, t_hw), lambda i, j: (i, j)),
        ],
        out_specs=pl.BlockSpec((t_r, t_hw), lambda i, j: (i, j)),
        compiler_params=_compiler_params(block_bytes),
    )(a_2d, b_2d)
    return out[:R, :HW] if (rp or cp) else out


def _mult_same_shape(a, b):
    """Elementwise multiply of two equal-shaped arrays through the Pallas kernel."""
    shape = a.shape
    if len(shape) >= 2:
        rows = math.prod(shape[:-2])
        cols = shape[-2] * shape[-1]
    else:
        rows = 1
        cols = math.prod(shape) if shape else 1
    out2d = _elementwise_mult(a.reshape(rows, cols), b.reshape(rows, cols))
    return out2d.reshape(shape)


# ------------------------------ public API ----------------------------------- #

def fusion_mult(x1, x2, x2_proj=None):
    """FusionMult.forward.

    x1: (B, C, H, W) float array.
    x2: (B, D) vector (projected/tiled over spatial dims), or an array with the
        same number of dims as x1 (plain torch-style broadcast multiply).
    x2_proj: optional (weight (D, C), bias (C,)) tuple mirroring nn.Linear(D, C).
    """
    x1 = jnp.asarray(x1)
    x2 = jnp.asarray(x2)

    # Mirror: `if x1.shape != x2.shape and len(x1.shape) != len(x2.shape): tile_x2(...)`
    if x1.shape != x2.shape and x1.ndim != x2.ndim:
        if x2_proj is not None:
            w, b = x2_proj
            # Tiny (B,D)@(D,C)+b: far below MXU/vreg tile sizes, so a dedicated
            # pallas_call is pure launch overhead -> plain jnp.dot in the wrapper.
            x2 = jnp.dot(x2, w, preferred_element_type=jnp.float32) + b
        scale = x2.astype(x1.dtype)

        if x1.ndim > scale.ndim and x1.shape[:scale.ndim] == scale.shape:
            # Lane-dense view: rows = prod(scale dims) on the sublane axis,
            # cols = trailing spatial dims on the lane axis. No broadcast copy.
            rows = math.prod(scale.shape)
            cols = math.prod(x1.shape[scale.ndim:])
            out2d = _row_scale_mult(x1.reshape(rows, cols), scale.reshape(rows, 1))
            return out2d.reshape(x1.shape)

        # Uncommon leading-dim broadcast (e.g. x2 has batch 1): materialize like
        # torch's repeat + broadcast multiply.
        scale = scale.reshape(scale.shape + (1,) * (x1.ndim - scale.ndim))
        out_shape = jnp.broadcast_shapes(x1.shape, scale.shape)
        return _mult_same_shape(jnp.broadcast_to(x1, out_shape),
                                jnp.broadcast_to(scale, out_shape))

    # Shapes / ndims already compatible: plain x1 * x2 (torch-style broadcast).
    if x1.shape != x2.shape:
        # Same-ndim broadcast. Common case: x2 == (..., 1, 1) channel scale ->
        # route through the row-scale kernel instead of materializing the broadcast.
        k = x2.ndim
        while k > 0 and x2.shape[k - 1] == 1:
            k -= 1
        if k < x1.ndim and x2.shape[:k] == x1.shape[:k]:
            rows = math.prod(x1.shape[:k]) if k else 1
            cols = math.prod(x1.shape[k:])
            out2d = _row_scale_mult(x1.reshape(rows, cols),
                                    x2.astype(x1.dtype).reshape(rows, 1))
            return out2d.reshape(x1.shape)
        # General broadcast fallback (rare).
        out_shape = jnp.broadcast_shapes(x1.shape, x2.shape)
        return _mult_same_shape(jnp.broadcast_to(x1, out_shape),
                                jnp.broadcast_to(x2.astype(x1.dtype), out_shape))

    return _mult_same_shape(x1, x2.astype(x1.dtype))


# --------------------------------- test -------------------------------------- #

if __name__ == "__main__":
    key = jax.random.PRNGKey(0)
    B, C, H, W, D = 2, 4, 16, 16, 8
    k1, k2, k3, k4, k5, k6 = jax.random.split(key, 6)

    x1 = jax.random.normal(k1, (B, C, H, W), jnp.float32)
    x2 = jax.random.normal(k2, (B, D), jnp.float32)
    # deterministic synthetic nn.Linear(D, C) params
    w = jax.random.normal(k3, (D, C), jnp.float32) * 0.1
    b = jax.random.normal(k4, (C,), jnp.float32) * 0.1

    # Branch 1: x2 needs projection + spatial tiling.
    out = fusion_mult(x1, x2, x2_proj=(w, b))
    jax.block_until_ready(out)
    ref = x1 * (x2 @ w + b)[:, :, None, None]
    assert out.shape == x1.shape
    assert jnp.allclose(out, ref, atol=1e-5, rtol=1e-5)

    # Branch 2: x2 is a (B, C) vector, no projection (identity tile).
    x2c = jax.random.normal(k5, (B, C), jnp.float32)
    out2 = fusion_mult(x1, x2c)
    jax.block_until_ready(out2)
    ref2 = x1 * x2c[:, :, None, None]
    assert jnp.allclose(out2, ref2, atol=1e-6, rtol=1e-6)

    # Branch 3: shapes already match -> plain elementwise multiply.
    x2full = jax.random.normal(k5, (B, C, H, W), jnp.float32)
    out3 = fusion_mult(x1, x2full)
    jax.block_until_ready(out3)
    assert jnp.allclose(out3, x1 * x2full, atol=1e-6, rtol=1e-6)

    # Branch 4: same-ndim (B, C, 1, 1) broadcast -> row-scale path, no broadcast copy.
    x2b = jax.random.normal(k6, (B, C, 1, 1), jnp.float32)
    out4 = fusion_mult(x1, x2b)
    jax.block_until_ready(out4)
    assert jnp.allclose(out4, x1 * x2b, atol=1e-6, rtol=1e-6)

    # Branch 5: unaligned spatial dims (H*W not a multiple of 128) -> padded path.
    x1u = jax.random.normal(k1, (B, C, 15, 15), jnp.float32)
    out5 = fusion_mult(x1u, x2c)
    jax.block_until_ready(out5)
    ref5 = x1u * x2c[:, :, None, None]
    assert jnp.allclose(out5, ref5, atol=1e-6, rtol=1e-6)

    print("KERNEL_OK")
</pallas_src>

<mosaic_0001>
module attributes {stable_mosaic.version = 11 : i64} {
  func.func @_row_scale_mult_kernel(%arg0: i32, %arg1: i32, %arg2: memref<8x1xf32, #tpu.memory_space<vmem>>, %arg3: memref<8x256xf32, #tpu.memory_space<vmem>>, %arg4: memref<8x256xf32, #tpu.memory_space<vmem>>) attributes {dimension_semantics = [#tpu.dimension_semantics<parallel>, #tpu.dimension_semantics<parallel>], iteration_bounds = array<i64: 1, 1>, scalar_prefetch = 0 : i64, scratch_operands = 0 : i64, tpu.core_type = #tpu.core_type<tc>, window_params = [{transform_indices = @transform_0, window_bounds = array<i64: 8, 1>}, {transform_indices = @transform_1, window_bounds = array<i64: 8, 256>}, {transform_indices = @transform_2, window_bounds = array<i64: 8, 256>}]} {
    %c0 = arith.constant 0 : index
    %c0_0 = arith.constant 0 : index
    %0 = vector.load %arg3[%c0, %c0_0] : memref<8x256xf32, #tpu.memory_space<vmem>>, vector<8x256xf32>
    %c0_1 = arith.constant 0 : index
    %c0_2 = arith.constant 0 : index
    %1 = vector.load %arg2[%c0_1, %c0_2] : memref<8x1xf32, #tpu.memory_space<vmem>>, vector<8x1xf32>
    %2 = vector.broadcast %1 : vector<8x1xf32> to vector<8x256xf32>
    %3 = arith.mulf %0, %2 : vector<8x256xf32>
    %c0_3 = arith.constant 0 : index
    %c0_4 = arith.constant 0 : index
    %4 = vector.load %arg4[%c0_3, %c0_4] : memref<8x256xf32, #tpu.memory_space<vmem>>, vector<8x256xf32>
    tpu.vector_store %arg4[%c0_3, %c0_4], %3 {strides = array<i32>} : memref<8x256xf32, #tpu.memory_space<vmem>>, vector<8x256xf32>,
    return
  }
  func.func @transform_0(%arg0: i32, %arg1: i32) -> (i32, i32) {
    %c0_i32 = arith.constant 0 : i32
    %c0_i32_0 = arith.constant 0 : i32
    return %arg0, %c0_i32 : i32, i32
  }
  func.func @transform_1(%arg0: i32, %arg1: i32) -> (i32, i32) {
    %c0_i32 = arith.constant 0 : i32
    return %arg0, %arg1 : i32, i32
  }
  func.func @transform_2(%arg0: i32, %arg1: i32) -> (i32, i32) {
    %c0_i32 = arith.constant 0 : i32
    return %arg0, %arg1 : i32, i32
  }
}

</mosaic_0001>

<llo_original>
// kernel: tpu_custom_call.1
$region0: #{tpu_custom_call.1}
  #allocation0 [shape = 'u32[]', space=smem, size = 0x4, offset = 0x4, fixed_abs, tag = 'smem constant byte address 0x4 - core index']
  #allocation1 [shape = 'u32[144,128]{1,0:T(1,128)}', space=vmem, size = 0x12000, scoped, tag = 'internal scratch']
  %s0 = inlined_call_operand.vmem [shape: f32[8,1], index: 0, kind: input, shape index: {}]
  %s1 = inlined_call_operand.hbm [shape: f32[8,256], index: 1, kind: input, shape index: {}]
  %s2 = inlined_call_operand.hbm [shape: f32[8,256], index: 2, kind: output, shape index: {}]
  %s3 = sld [smem:[#allocation0]]
  $region22: #{tpu_custom_call.1} parent=0
    _
  %s5 = ssub.s32 1, %s3
  %s6 = scalar_select 0, %s5, %s3
  $region1: #{tpu_custom_call.1} parent=0
    #allocation2 [shape = 'u8[8192]{0}', space=vmem, size = 0x2000, scoped, tag = 'input window, operand 1, single buffered']
    #allocation3 [shape = 's32[1]{0}', space=sflag, size = 0x4, scoped, tag = 'scoped memory for tpu_custom_call.1']
    #allocation4 [shape = 's32[1]{0}', space=sflag, size = 0x4, scoped, tag = 'scoped memory for tpu_custom_call.1']
    #allocation5 [shape = 'u8[8192]{0}', space=vmem, size = 0x2000, scoped, tag = 'output window, operand 0, single buffered']
    %7 = vsyncpa [#allocation3], 0
    %8 = vsyncpa [#allocation4], 0
    // Predicated region
    $region2: #{tpu_custom_call.1} parent=1 // pred_check
      _
    $region3: #{tpu_custom_call.1} parent=1 // pred_check_branch
      %10 = sbr.rel (0) target = $region5
    $region4: #{tpu_custom_call.1} parent=1 // pred_region
      _
    $region5: #{tpu_custom_call.1} parent=1 // pred_fallthru
      _
    // Predicated region
    $region6: #{tpu_custom_call.1} parent=1 // pred_check
      _
    $region7: #{tpu_custom_call.1} parent=1 // pred_check_branch
      %12 = sbr.rel (0) target = $region9
    $region8: #{tpu_custom_call.1} parent=1 // pred_region
      %s14 = ssub.s32 256, 256
      %15 = vsyncadd [#allocation3], %s14
      %s17 = sshll.u32 [#allocation2], 4
      %s18 = int_to_ptr.vmem [resolvable:$true] %s17
      %20 = dma.hbm_to_vmem [thread:$0]  %s1, 256, %s18, [#allocation3]
    $region9: #{tpu_custom_call.1} parent=1 // pred_fallthru
      _
    // Predicated region
    $region10: #{tpu_custom_call.1} parent=1 // pred_check
      _
    $region11: #{tpu_custom_call.1} parent=1 // pred_check_branch
      %22 = sbr.rel (0) target = $region13
    $region12: #{tpu_custom_call.1} parent=1 // pred_region
      %23 = dma.done [#allocation3], 256
    $region13: #{tpu_custom_call.1} parent=1 // pred_fallthru
      _
    %v24 = vld [vmem:[#allocation2] sm:$0xff]
    %v25 = vld [vmem:[#allocation2 + $0x8] sm:$0xff]
    %v26 = vld [vmem:[%s0] sm:$0xff]
    %28 = vset.pattern.permute.xlu0 0
    %29 = vperm.xlu0 %28, %v26
    %v30 = vpop.permute.xlu0 %29
    %v32 = vmul.f32 %v24, %v30
    %v33 = vmul.f32 %v25, %v30
    %34 = vst [vmem:[#allocation5] sm:$0xff] %v32
    %35 = vst [vmem:[#allocation5 + $0x8] sm:$0xff] %v33
    // Predicated region
    $region14: #{tpu_custom_call.1} parent=1 // pred_check
      _
    $region15: #{tpu_custom_call.1} parent=1 // pred_check_branch
      %37 = sbr.rel (0) target = $region17
    $region16: #{tpu_custom_call.1} parent=1 // pred_region
      %s39 = ssub.s32 256, 256
      %40 = vsyncadd [#allocation4], %s39
      %s42 = sshll.u32 [#allocation5], 4
      %s43 = int_to_ptr.vmem [resolvable:$true] %s42
      %45 = dma.vmem_to_hbm [thread:$0]  %s43, 256, %s2, [#allocation4]
    $region17: #{tpu_custom_call.1} parent=1 // pred_fallthru
      _
    // Predicated region
    $region18: #{tpu_custom_call.1} parent=1 // pred_check
      _
    $region19: #{tpu_custom_call.1} parent=1 // pred_check_branch
      %47 = sbr.rel (0) target = $region21
    $region20: #{tpu_custom_call.1} parent=1 // pred_region
      %48 = dma.done [#allocation4], 256
    $region21: #{tpu_custom_call.1} parent=1 // pred_fallthru
      _
    %49 = vsyncpa [#allocation3], 1
    %50 = vsyncpa [#allocation4], 1

</llo_original>
